<compile_context>
chip_gen: v7x
topology: tpu7x:2x2x1
jax: 0.10.0
libtpu: 0.0.40
codegen_flags: <defaults>
</compile_context>

<pallas_src>
import math

import numpy as np
import jax
import jax.numpy as jnp
from jax.experimental import pallas as pl
from jax.experimental.pallas import tpu as pltpu

RRELU_SLOPE = (1.0 / 8.0 + 1.0 / 3.0) / 2.0   # F.rrelu, training=False

_LANE = 128        # feature dim padded to a multiple of this (lane width)


def _round_up(x, m):
    return ((x + m - 1) // m) * m


# ----------------------------------------------------------------------------
# Kernel 1: grouped-by-relation edge message matmul (scalar-prefetch P2).
#   tile_gid : (n_tiles,) int32 SMEM  -- relation type of each edge tile
#   h_src    : (E_pad, D_pad) bf16    -- gathered source features (sorted by
#                                        relation type)
#   bdw      : (R, D_pad, D_pad) bf16 -- per-relation block-diagonal weight
#   msg      : (E_pad, D_pad) bf16    -- msg tile = h_tile @ bdw[gid[tile]]
# ----------------------------------------------------------------------------
def _edge_msg_kernel(gid_ref, h_ref, w_ref, msg_ref):
    del gid_ref  # consumed by the index maps only
    msg_ref[...] = jnp.dot(
        h_ref[...], w_ref[0], preferred_element_type=jnp.float32
    ).astype(msg_ref.dtype)


def edge_messages(tile_gid, h_src, bdw, msg_tile):
    e_pad, d_pad = h_src.shape
    n_tiles = e_pad // msg_tile
    return pl.pallas_call(
        _edge_msg_kernel,
        out_shape=jax.ShapeDtypeStruct((e_pad, d_pad), jnp.bfloat16),
        grid_spec=pltpu.PrefetchScalarGridSpec(
            num_scalar_prefetch=1,
            grid=(n_tiles,),
            in_specs=[
                pl.BlockSpec((msg_tile, d_pad), lambda i, gid: (i, 0)),
                pl.BlockSpec((1, d_pad, d_pad), lambda i, gid: (gid[i], 0, 0)),
            ],
            out_specs=pl.BlockSpec((msg_tile, d_pad), lambda i, gid: (i, 0)),
        ),
        compiler_params=pltpu.CompilerParams(
            dimension_semantics=("parallel",),
            vmem_limit_bytes=32 * 1024 * 1024,
        ),
    )(tile_gid, h_src, bdw)


# ----------------------------------------------------------------------------
# Kernel 2: block-sparse scatter-sum + self-loop + rrelu.
#   prefetch blk_flat : (n_node_tiles*max_active,) int32 -- adj block id
#            kt_flat  : (n_node_tiles*max_active,) int32 -- msg K-tile index
#            n_active : (n_node_tiles,) int32            -- valid entries per i
#   adj_blocks : (P, tm, agg_k) bf16  -- only non-empty normalized adj blocks
#   msg        : (E_pad, D_pad) bf16
#   h          : (N_pad, D_pad) bf16  -- layer-input features (self loop)
#   loop_w     : (D_pad, D_pad) bf16
#   out        : (N_pad, D_pad) bf16/f32
# ----------------------------------------------------------------------------
def _agg_kernel(blk_ref, kt_ref, nact_ref, adj_ref, msg_ref, h_ref, lw_ref,
                out_ref, acc_ref):
    del blk_ref, kt_ref  # consumed by the index maps only
    i = pl.program_id(0)
    j = pl.program_id(1)

    # self-loop matmul initializes the accumulator (overlaps with the pipeline
    # instead of sitting in the serial epilogue)
    @pl.when(j == 0)
    def _():
        acc_ref[...] = jnp.dot(h_ref[...], lw_ref[...],
                               preferred_element_type=jnp.float32)

    # only accumulate real (non-pad) adjacency blocks for this node tile
    @pl.when(j < nact_ref[i])
    def _():
        acc_ref[...] += jnp.dot(adj_ref[0], msg_ref[...],
                                preferred_element_type=jnp.float32)

    @pl.when(j == pl.num_programs(1) - 1)
    def _():
        x = acc_ref[...]
        out_ref[...] = jnp.where(x >= 0.0, x, RRELU_SLOPE * x).astype(out_ref.dtype)


def aggregate_apply(blk_flat, kt_flat, n_active, adj_blocks, msg, h, lw,
                    tm, max_active, out_dtype):
    _, _, agg_k = adj_blocks.shape
    n_pad = h.shape[0]
    d_pad = msg.shape[1]
    n_tiles_n = n_pad // tm

    def adj_map(i, j, blk, kt, na):
        return (blk[i * max_active + j], 0, 0)

    def msg_map(i, j, blk, kt, na):
        return (kt[i * max_active + j], 0)

    return pl.pallas_call(
        _agg_kernel,
        out_shape=jax.ShapeDtypeStruct((n_pad, d_pad), out_dtype),
        grid_spec=pltpu.PrefetchScalarGridSpec(
            num_scalar_prefetch=3,
            grid=(n_tiles_n, max_active),
            in_specs=[
                pl.BlockSpec((1, tm, agg_k), adj_map),
                pl.BlockSpec((agg_k, d_pad), msg_map),
                pl.BlockSpec((tm, d_pad), lambda i, j, blk, kt, na: (i, 0)),
                pl.BlockSpec((d_pad, d_pad), lambda i, j, blk, kt, na: (0, 0)),
            ],
            out_specs=pl.BlockSpec((tm, d_pad), lambda i, j, blk, kt, na: (i, 0)),
            scratch_shapes=[pltpu.VMEM((tm, d_pad), jnp.float32)],
        ),
        compiler_params=pltpu.CompilerParams(
            dimension_semantics=("parallel", "arbitrary"),
            vmem_limit_bytes=32 * 1024 * 1024,
        ),
    )(blk_flat, kt_flat, n_active, adj_blocks, msg, h, lw)


# ----------------------------------------------------------------------------
# Host-side graph preprocessing: sort edges by relation, pad groups, build
# the block-sparse normalized adjacency + prefetch tables.
# ----------------------------------------------------------------------------
def _preprocess_graph(edge_src, edge_dst, edge_type, n_nodes, num_rels):
    es = np.asarray(edge_src, dtype=np.int64).reshape(-1)
    ed = np.asarray(edge_dst, dtype=np.int64).reshape(-1)
    et = np.asarray(edge_type, dtype=np.int64).reshape(-1)
    n_edges = es.shape[0]
    n_nodes = max(int(n_nodes), 1)

    # --- node tiling: multiple of 16 (bf16 sublane pair), >=2 tiles if possible
    tm = min(512, _round_up(n_nodes, 16))
    if tm >= 32 and _round_up(n_nodes, tm) == tm:
        tm = _round_up(tm // 2, 16)
    n_pad = _round_up(n_nodes, tm)
    n_tiles_n = n_pad // tm

    # --- group edges by relation, pad each group to the message tile ---------
    groups = [np.nonzero(et == r)[0] for r in range(num_rels)]
    nonempty = [g for g in groups if g.shape[0] > 0]
    avg_group = (n_edges / max(1, len(nonempty))) if nonempty else 0.0
    if avg_group >= 1024:
        msg_tile = 512
    elif avg_group >= 256:
        msg_tile = 256
    else:
        msg_tile = 128

    src_chunks, dst_chunks, tile_gid = [], [], []
    for r, idx in enumerate(groups):
        cnt = idx.shape[0]
        if cnt == 0:
            continue
        cnt_pad = _round_up(cnt, msg_tile)
        sp = np.zeros((cnt_pad,), np.int32)
        sp[:cnt] = es[idx]
        dp = np.full((cnt_pad,), -1, np.int32)      # pad edges hit no node row
        dp[:cnt] = ed[idx]
        src_chunks.append(sp)
        dst_chunks.append(dp)
        tile_gid.extend([r] * (cnt_pad // msg_tile))

    if src_chunks:
        src_pad = np.concatenate(src_chunks)
        dst_pad = np.concatenate(dst_chunks)
    else:                                            # graph with zero edges
        src_pad = np.zeros((msg_tile,), np.int32)
        dst_pad = np.full((msg_tile,), -1, np.int32)
        tile_gid = [0]
    tile_gid = np.asarray(tile_gid, np.int32)
    e_pad0 = src_pad.shape[0]

    # --- aggregation K tile (decoupled from msg_tile, a multiple of it) ------
    agg_k = min(512, e_pad0)
    e_pad = _round_up(e_pad0, agg_k)
    if e_pad > e_pad0:
        extra = e_pad - e_pad0
        src_pad = np.concatenate([src_pad, np.zeros((extra,), np.int32)])
        dst_pad = np.concatenate([dst_pad, np.full((extra,), -1, np.int32)])
        tile_gid = np.concatenate(
            [tile_gid, np.zeros((extra // msg_tile,), np.int32)])

    # --- in-degree norm (bf16-rounded later, matching the reference) ---------
    if n_edges > 0:
        in_deg = np.bincount(ed, minlength=n_nodes).astype(np.float32)
    else:
        in_deg = np.zeros((n_nodes,), np.float32)
    norm = 1.0 / np.maximum(in_deg, 1.0)

    # --- block-sparse normalized adjacency: only (node-tile, K-tile) blocks
    #     that contain at least one real edge are materialized. ---------------
    valid_e = dst_pad >= 0
    edge_cols = np.nonzero(valid_e)[0]
    edge_dsts = dst_pad[edge_cols]

    active = []
    for i in range(n_tiles_n):
        lo, hi = i * tm, (i + 1) * tm
        sel = (edge_dsts >= lo) & (edge_dsts < hi)
        ks = np.unique(edge_cols[sel] // agg_k)
        active.append(ks.astype(np.int64))
    max_active = max(1, max((a.shape[0] for a in active), default=1))

    blocks = []
    blk_flat = np.zeros((n_tiles_n * max_active,), np.int32)
    kt_flat = np.zeros((n_tiles_n * max_active,), np.int32)
    n_active = np.zeros((n_tiles_n,), np.int32)
    for i, ks in enumerate(active):
        lo = i * tm
        n_active[i] = ks.shape[0]
        for j, kk in enumerate(ks):
            cols = np.arange(kk * agg_k, (kk + 1) * agg_k)
            d = dst_pad[cols]
            sel = (d >= lo) & (d < lo + tm)
            blk = np.zeros((tm, agg_k), np.float32)
            blk[d[sel] - lo, np.nonzero(sel)[0]] = norm[d[sel]]
            blk_flat[i * max_active + j] = len(blocks)
            kt_flat[i * max_active + j] = kk
            blocks.append(blk)
        last = max(int(n_active[i]) - 1, 0)
        for j in range(int(n_active[i]), max_active):   # pad entries (guarded off)
            blk_flat[i * max_active + j] = blk_flat[i * max_active + last]
            kt_flat[i * max_active + j] = kt_flat[i * max_active + last]
    if not blocks:
        blocks.append(np.zeros((tm, agg_k), np.float32))
    adj_blocks = np.stack(blocks, axis=0)

    return (src_pad, tile_gid, adj_blocks, blk_flat, kt_flat, n_active,
            tm, n_pad, msg_tile, max_active)


# ----------------------------------------------------------------------------
# Aggregator wrapper (rgcn encoder, self_loop=True, bias=None, dropout=0.0)
# ----------------------------------------------------------------------------
def aggregator_forward(node_id, edge_src, edge_dst, edge_type,
                       ent_embeds, rel_embeds, layer_params, num_bases):
    del rel_embeds  # rgcn message function never reads per-edge relation feats
    h_dim = ent_embeds.shape[1]
    num_rels = layer_params[0]["weight"].shape[0]
    si = h_dim // num_bases
    so = h_dim // num_bases
    n_nodes = int(node_id.shape[0])
    d_pad = _round_up(h_dim, _LANE)

    (src_pad_np, tile_gid_np, adj_blocks_np, blk_flat_np, kt_flat_np,
     n_active_np, tm, n_pad, msg_tile, max_active) = _preprocess_graph(
        edge_src, edge_dst, edge_type, n_nodes, num_rels)

    src_pad = jnp.asarray(src_pad_np)
    tile_gid = jnp.asarray(tile_gid_np)
    adj_blocks = jnp.asarray(adj_blocks_np, dtype=jnp.bfloat16)
    blk_flat = jnp.asarray(blk_flat_np)
    kt_flat = jnp.asarray(kt_flat_np)
    n_active = jnp.asarray(n_active_np)

    # g.ndata['h'] = ent_embeds[id], padded to (n_pad, d_pad) in bf16; padded
    # rows / feature columns stay exactly zero through every layer.
    h0 = ent_embeds[node_id].reshape(-1, h_dim).astype(jnp.bfloat16)
    h = jnp.zeros((n_pad, d_pad), jnp.bfloat16).at[:n_nodes, :h_dim].set(h0)

    n_layers = len(layer_params)
    for li, params in enumerate(layer_params):
        weight = params["weight"].astype(jnp.float32)        # (R, B*si*so)
        loop_w = params["loop_weight"].astype(jnp.float32)    # (D, D)

        # per-relation block-diagonal (d_pad, d_pad) weight, streamed once per
        # relation group by the grouped matmul instead of once per edge.
        # TODO(synk): for si << 128, pack bases along the sublane axis instead
        # of a mostly-zero block-diagonal weight.
        wb = weight.reshape(num_rels, num_bases, si, so)
        bdw = jnp.zeros((num_rels, d_pad, d_pad), jnp.float32)
        for b in range(num_bases):
            bdw = bdw.at[:, b * si:(b + 1) * si, b * so:(b + 1) * so].set(wb[:, b])
        bdw = bdw.astype(jnp.bfloat16)

        lw_pad = jnp.zeros((d_pad, d_pad), jnp.float32).at[:h_dim, :h_dim].set(loop_w)
        lw_pad = lw_pad.astype(jnp.bfloat16)

        # pad-edge messages are killed by all-zero adjacency columns, so no
        # validity masking of the gathered sources is needed.
        h_src = h[src_pad]                                    # (E_pad, D_pad) bf16
        msg = edge_messages(tile_gid, h_src, bdw, msg_tile)   # (E_pad, D_pad) bf16

        out_dtype = jnp.float32 if li == n_layers - 1 else jnp.bfloat16
        h = aggregate_apply(blk_flat, kt_flat, n_active, adj_blocks, msg,
                            h, lw_pad, tm, max_active, out_dtype)

    return h[:n_nodes, :h_dim]


# ----------------------------------------------------------------------------
# Pure-JAX reference (same math, same bf16 operand rounding) for validation.
# ----------------------------------------------------------------------------
def _reference_forward(node_id, edge_src, edge_dst, edge_type,
                       ent_embeds, rel_embeds, layer_params, num_bases):
    del rel_embeds
    h_dim = ent_embeds.shape[1]
    B = num_bases
    si = so = h_dim // B
    n_nodes = node_id.shape[0]
    n_edges = edge_src.shape[0]

    def bf(x):  # mimic the bf16 operand rounding used by the kernels
        return x.astype(jnp.bfloat16).astype(jnp.float32)

    h = ent_embeds[node_id].reshape(-1, h_dim).astype(jnp.float32)
    in_deg = jnp.zeros((n_nodes,), jnp.float32).at[edge_dst].add(1.0)
    norm = bf(1.0 / jnp.maximum(in_deg, 1.0))

    for params in layer_params:
        hb = bf(h)
        w = bf(params["weight"])[edge_type].reshape(n_edges, B, si, so)
        lw = bf(params["loop_weight"])
        hs = hb[edge_src].reshape(n_edges, B, si)
        msg = jnp.einsum("ebi,ebio->ebo", hs, w).reshape(n_edges, h_dim)
        msg = bf(msg)
        agg = jnp.zeros((n_nodes, h_dim), jnp.float32).at[edge_dst].add(
            msg * norm[edge_dst, None])
        x = agg + hb @ lw
        h = jnp.where(x >= 0.0, x, RRELU_SLOPE * x)
    return h


def _xavier_normal(key, shape, gain=math.sqrt(2.0)):
    fan_in, fan_out = shape
    std = gain * math.sqrt(2.0 / (fan_in + fan_out))
    return std * jax.random.normal(key, shape, dtype=jnp.float32)


if __name__ == "__main__":
    # small config consistent with Aggregator(h_dim, num_ents, num_edges,
    # num_bases, n_hidden_layers, 'rgcn', self_loop=True, dropout=0.0)
    h_dim = 32
    num_ents = 10
    num_rel_types = 6      # "num_edges" in the module = number of relation types
    num_bases = 4          # submat_in = submat_out = 8
    n_hidden_layers = 2
    n_nodes = 8            # nodes in the graph
    n_edges = 16           # edges in the graph

    key = jax.random.PRNGKey(0)
    keys = jax.random.split(key, 8 + 2 * n_hidden_layers)

    ent_embeds = jax.random.normal(keys[0], (num_ents, h_dim), dtype=jnp.float32)
    rel_embeds = jax.random.normal(keys[1], (num_rel_types, h_dim), dtype=jnp.float32)

    node_id = jax.random.randint(keys[2], (n_nodes,), 0, num_ents)
    edge_src = jax.random.randint(keys[3], (n_edges,), 0, n_nodes)
    edge_dst = jax.random.randint(keys[4], (n_edges,), 0, n_nodes)
    edge_type = jax.random.randint(keys[5], (n_edges,), 0, num_rel_types)

    si = so = h_dim // num_bases
    layer_params = []
    for layer_idx in range(n_hidden_layers):
        kw = keys[8 + 2 * layer_idx]
        kl = keys[8 + 2 * layer_idx + 1]
        layer_params.append({
            "weight": _xavier_normal(kw, (num_rel_types, num_bases * si * so)),
            "loop_weight": _xavier_normal(kl, (h_dim, h_dim)),
        })

    out = aggregator_forward(node_id, edge_src, edge_dst, edge_type,
                             ent_embeds, rel_embeds, layer_params, num_bases)
    out = jax.block_until_ready(out)

    ref = _reference_forward(node_id, edge_src, edge_dst, edge_type,
                             ent_embeds, rel_embeds, layer_params, num_bases)
    assert out.shape == (n_nodes, h_dim)
    assert jnp.allclose(out, ref, atol=2e-2, rtol=2e-2), (
        float(jnp.max(jnp.abs(out - ref))))

    print("KERNEL_OK")
</pallas_src>

<mosaic_0001>
module attributes {stable_mosaic.version = 11 : i64} {
  func.func @_edge_msg_kernel(%arg0: i32, %arg1: memref<8xi32, #tpu.memory_space<smem>>, %arg2: memref<128x128xbf16, #tpu.memory_space<vmem>>, %arg3: memref<1x128x128xbf16, #tpu.memory_space<vmem>>, %arg4: memref<128x128xbf16, #tpu.memory_space<vmem>>) attributes {dimension_semantics = [#tpu.dimension_semantics<parallel>], iteration_bounds = array<i64: 8>, scalar_prefetch = 1 : i64, scratch_operands = 0 : i64, tpu.core_type = #tpu.core_type<tc>, window_params = [{transform_indices = @transform_0, window_bounds = array<i64: 128, 128>}, {transform_indices = @transform_1, window_bounds = array<i64: 1, 128, 128>}, {transform_indices = @transform_2, window_bounds = array<i64: 128, 128>}]} {
    %c0 = arith.constant 0 : index
    %c0_0 = arith.constant 0 : index
    %0 = vector.load %arg2[%c0, %c0_0] : memref<128x128xbf16, #tpu.memory_space<vmem>>, vector<128x128xbf16>
    %c0_1 = arith.constant 0 : index
    %c0_2 = arith.constant 0 : index
    %c0_3 = arith.constant 0 : index
    %1 = vector.load %arg3[%c0_1, %c0_2, %c0_3] : memref<1x128x128xbf16, #tpu.memory_space<vmem>>, vector<1x128x128xbf16>
    %2 = vector.shape_cast %1 : vector<1x128x128xbf16> to vector<128x128xbf16>
    %cst = arith.constant dense<0.000000e+00> : vector<128x128xf32>
    %3 = tpu.matmul %0, %2, %cst {dimension_numbers = #tpu.dot_dimension_numbers<[1], [0], [0], [1], [0, 0, 1, 1], [], []>} : vector<128x128xbf16>, vector<128x128xbf16>, vector<128x128xf32> -> vector<128x128xf32>
    %4 = arith.truncf %3 : vector<128x128xf32> to vector<128x128xbf16>
    %c0_4 = arith.constant 0 : index
    %c0_5 = arith.constant 0 : index
    %5 = vector.load %arg4[%c0_4, %c0_5] : memref<128x128xbf16, #tpu.memory_space<vmem>>, vector<128x128xbf16>
    tpu.vector_store %arg4[%c0_4, %c0_5], %4 {strides = array<i32>} : memref<128x128xbf16, #tpu.memory_space<vmem>>, vector<128x128xbf16>,
    return
  }
  func.func @transform_0(%arg0: i32, %arg1: memref<8xi32, #tpu.memory_space<smem>>) -> (i32, i32) {
    %c0_i32 = arith.constant 0 : i32
    %c0_i32_0 = arith.constant 0 : i32
    return %arg0, %c0_i32 : i32, i32
  }
  func.func @transform_1(%arg0: i32, %arg1: memref<8xi32, #tpu.memory_space<smem>>) -> (i32, i32, i32) {
    %0 = arith.index_cast %arg0 : i32 to index
    %1 = memref.load %arg1[%0] : memref<8xi32, #tpu.memory_space<smem>>
    %c0_i32 = arith.constant 0 : i32
    %c0_i32_0 = arith.constant 0 : i32
    %c0_i32_1 = arith.constant 0 : i32
    return %1, %c0_i32, %c0_i32_0 : i32, i32, i32
  }
  func.func @transform_2(%arg0: i32, %arg1: memref<8xi32, #tpu.memory_space<smem>>) -> (i32, i32) {
    %c0_i32 = arith.constant 0 : i32
    %c0_i32_0 = arith.constant 0 : i32
    return %arg0, %c0_i32 : i32, i32
  }
}

</mosaic_0001>

<llo_original>
// kernel: tpu_custom_call.1
$region0: #{tpu_custom_call.1}
  #allocation0 [shape = 'u32[]', space=smem, size = 0x4, offset = 0x4, fixed_abs, tag = 'smem constant byte address 0x4 - core index']
  #allocation1 [shape = 'u32[144,128]{1,0:T(1,128)}', space=vmem, size = 0x12000, scoped, tag = 'internal scratch']
  #allocation2 [shape = 's32[1]{0}', space=sflag, size = 0x4, scoped, tag = 'scoped memory for tpu_custom_call.1']
  #allocation3 [shape = 'u8[512]{0}', space=smem, size = 0x200, scoped, tag = 'prefetched SMEM operand 0']
  %s0 = inlined_call_operand.hbm [shape: s32[8], index: 0, kind: input, shape index: {}]
  %s1 = inlined_call_operand.hbm [shape: bf16[1024,128], index: 1, kind: input, shape index: {}]
  %s2 = inlined_call_operand.hbm [shape: bf16[6,128,128], index: 2, kind: input, shape index: {}]
  %s3 = inlined_call_operand.hbm [shape: bf16[1024,128], index: 3, kind: output, shape index: {}]
  %s4 = sld [smem:[#allocation0]]
  $region49: #{tpu_custom_call.1} parent=0
    _
  %s6 = ssub.s32 1, %s4
  %s7 = scalar_select 0, %s6, %s4
  %9 = dma.hbm_to_smem %s0, 16, [#allocation3], [#allocation2]
  %10 = dma.done [#allocation2], 16
  %11 = sfence
  $region1: #{tpu_custom_call.1} parent=0
    #allocation4 [shape = 'u8[65536]{0}', space=vmem, size = 0x10000, scoped, tag = 'input window, operand 1']
    #allocation5 [shape = 's32[2]{0}', space=sflag, size = 0x8, scoped, tag = 'scoped memory for tpu_custom_call.1']
    #allocation6 [shape = 's32[2]{0}', space=sflag, size = 0x8, scoped, tag = 'scoped memory for tpu_custom_call.1']
    #allocation7 [shape = 'u8[65536]{0}', space=vmem, size = 0x10000, scoped, tag = 'input window, operand 2']
    #allocation8 [shape = 's32[2]{0}', space=sflag, size = 0x8, scoped, tag = 'scoped memory for tpu_custom_call.1']
    #allocation9 [shape = 'u8[65536]{0}', space=vmem, size = 0x10000, scoped, tag = 'output window, operand 0']
    %12 = vsyncpa [#allocation5], 0
    %s13 = scalar_lea.sflag [#allocation5], 1
    %14 = vsyncpa %s13, 0
    %15 = vsyncpa [#allocation8], 0
    %s16 = scalar_lea.sflag [#allocation8], 1
    %17 = vsyncpa %s16, 0
    %18 = vsyncpa [#allocation6], 0
    %s19 = scalar_lea.sflag [#allocation6], 1
    %20 = vsyncpa %s19, 0
    loop: start=0, step=1, limit=10
    $region2: #{tpu_custom_call.1} parent=1 // loop_pre_header
      _
    $region3: #{tpu_custom_call.1} parent=1 // loop_header
      %s22 = sphi 0, %s26
      %p23 = scmp.ge.s32.totalorder %s22, 10
      %s32 = sphi 0, %s34
      %s35 = sphi 0, %s32
      %s36 = sphi 0, %s35
      %s52 = sphi 0, %s36
      %s60 = sphi 0, %s62
      %s63 = sphi 0, %s60
      %s64 = sphi 0, %s63
      %s80 = sphi 0, %s64
      %s86 = sphi 0, %s88
      %s89 = sphi 0, %s86
      %s90 = sphi 0, %s89
      %s106 = sphi 0, %s90
    $region4: #{tpu_custom_call.1} parent=1 // loop_header_branch
      %25 = sbr.rel (%p23) target = $region8
    $region5: #{tpu_custom_call.1} parent=1 // loop_body
      %s27 = ssub.s32 %s22, 1
      %s28 = ssub.s32 %s22, 2
      %s29 = sadd.s32 %s22, 1
      %s30 = ssub.s32 %s22, %s29
      %p31 = scmp.eq.s32.totalorder %s30, 0
      %s33 = sadd.s32 %s32, 1
      %s34 = scalar_select %p31, %s32, %s33
      %p37 = pneg %p31
      %p38 = scmp.eq.s32.totalorder %s22, 7
      %p39 = por %p37, %p38
      %p40 = scmp.ne.s32.totalorder %s32, %s35
      %p41 = scmp.eq.s32.totalorder %s22, 0
      %p42 = por %p40, %p41
      %p43 = scmp.ne.s32.totalorder %s32, %s35
      %p44 = scmp.eq.s32.totalorder %s27, 7
      %p45 = por %p43, %p44
      %p46 = scmp.ne.s32.totalorder %s35, %s36
      %p47 = scmp.eq.s32.totalorder %s27, 0
      %p48 = por %p46, %p47
      %p49 = scmp.ne.s32.totalorder %s35, %s36
      %p50 = scmp.eq.s32.totalorder %s28, 7
      %p51 = por %p49, %p50
      %p53 = scmp.ne.s32.totalorder %s36, %s52
      %p54 = scmp.eq.s32.totalorder %s28, 0
      %p55 = por %p53, %p54
      %s56 = sld [smem:[#allocation3 + %s22]]
      %s57 = sld [smem:[#allocation3 + %s29]]
      %s58 = ssub.s32 %s56, %s57
      %p59 = scmp.eq.s32.totalorder %s58, 0
      %s61 = sadd.s32 %s60, 1
      %s62 = scalar_select %p59, %s60, %s61
      %p65 = pneg %p59
      %p66 = scmp.eq.s32.totalorder %s22, 7
      %p67 = por %p65, %p66
      %p68 = scmp.ne.s32.totalorder %s60, %s63
      %p69 = scmp.eq.s32.totalorder %s22, 0
      %p70 = por %p68, %p69
      %p71 = scmp.ne.s32.totalorder %s60, %s63
      %p72 = scmp.eq.s32.totalorder %s27, 7
      %p73 = por %p71, %p72
      %p74 = scmp.ne.s32.totalorder %s63, %s64
      %p75 = scmp.eq.s32.totalorder %s27, 0
      %p76 = por %p74, %p75
      %p77 = scmp.ne.s32.totalorder %s63, %s64
      %p78 = scmp.eq.s32.totalorder %s28, 7
      %p79 = por %p77, %p78
      %p81 = scmp.ne.s32.totalorder %s64, %s80
      %p82 = scmp.eq.s32.totalorder %s28, 0
      %p83 = por %p81, %p82
      %s84 = ssub.s32 %s22, %s29
      %p85 = scmp.eq.s32.totalorder %s84, 0
      %s87 = sadd.s32 %s86, 1
      %s88 = scalar_select %p85, %s86, %s87
      %p91 = pneg %p85
      %p92 = scmp.eq.s32.totalorder %s22, 7
      %p93 = por %p91, %p92
      %p94 = scmp.ne.s32.totalorder %s86, %s89
      %p95 = scmp.eq.s32.totalorder %s22, 0
      %p96 = por %p94, %p95
      %p97 = scmp.ne.s32.totalorder %s86, %s89
      %p98 = scmp.eq.s32.totalorder %s27, 7
      %p99 = por %p97, %p98
      %p100 = scmp.ne.s32.totalorder %s89, %s90
      %p101 = scmp.eq.s32.totalorder %s27, 0
      %p102 = por %p100, %p101
      %p103 = scmp.ne.s32.totalorder %s89, %s90
      %p104 = scmp.eq.s32.totalorder %s28, 7
      %p105 = por %p103, %p104
      %p107 = scmp.ne.s32.totalorder %s90, %s106
      %p108 = scmp.eq.s32.totalorder %s28, 0
      %p109 = por %p107, %p108
      %p110 = scmp.le.s32.totalorder 1, %s22
      %p111 = scmp.lt.s32.totalorder %s22, 9
      %p112 = pnand %p110, %p111
      %p113 = pneg %p112
      // Predicated region
      $region9: #{tpu_custom_call.1} parent=5 // pred_check
        _
      $region10: #{tpu_custom_call.1} parent=5 // pred_check_branch
        %115 = sbr.rel (%p112) target = $region12
      $region11: #{tpu_custom_call.1} parent=5 // pred_region
        %s116 = ssub.s32 %s22, 1
      $region12: #{tpu_custom_call.1} parent=5 // pred_fallthru
        _
      %p117 = scmp.lt.s32.totalorder %s22, 8
      // Predicated region
      $region13: #{tpu_custom_call.1} parent=5 // pred_check
        %p118 = pneg %p117
      $region14: #{tpu_custom_call.1} parent=5 // pred_check_branch
        %120 = sbr.rel (%p118) target = $region16
      $region15: #{tpu_custom_call.1} parent=5 // pred_region
        // Predicated region
        $region17: #{tpu_custom_call.1} parent=15 // pred_check
          %p121 = pneg %p42
        $region18: #{tpu_custom_call.1} parent=15 // pred_check_branch
          %123 = sbr.rel (%p121) target = $region20
        $region19: #{tpu_custom_call.1} parent=15 // pred_region
          %s124 = sand.u32 %s32, 1
          %s125 = scalar_lea.sflag [#allocation5], %s124
          %s126 = sand.u32 %s32, 1
          %s127 = smul.addr %s126, 64
          %s128 = scalar_lea.vmem [#allocation4], %s127
          %s129 = smul.u32 16, %s22
          %s131 = ssub.s32 1024, 1024
          %132 = vsyncadd %s125, %s131
          %s133 = smul.addr %s129, 64
          %s134 = scalar_lea.hbm %s1, %s133
          %s135 = sshll.u32 %s128, 4
          %s136 = int_to_ptr.vmem [resolvable:$true] %s135
          %141 = dma.hbm_to_vmem [thread:$0]  %s134, 1024, %s136, %s125, 64, 64, 4
        $region20: #{tpu_custom_call.1} parent=15 // pred_fallthru
          _
        // Predicated region
        $region21: #{tpu_custom_call.1} parent=15 // pred_check
          %p142 = pneg %p70
        $region22: #{tpu_custom_call.1} parent=15 // pred_check_branch
          %144 = sbr.rel (%p142) target = $region24
        $region23: #{tpu_custom_call.1} parent=15 // pred_region
          %s145 = sand.u32 %s60, 1
          %s146 = scalar_lea.sflag [#allocation8], %s145
          %s147 = sand.u32 %s60, 1
          %s148 = smul.addr %s147, 64
          %s149 = scalar_lea.vmem [#allocation7], %s148
          %s150 = sld [smem:[#allocation3 + %s22]]
          %s152 = ssub.s32 1024, 1024
          %153 = vsyncadd %s146, %s152
          %s154 = smul.addr %s150, 16
          %s155 = smul.addr %s154, 64
          %s156 = scalar_lea.hbm %s2, %s155
          %s157 = sshll.u32 %s149, 4
          %s158 = int_to_ptr.vmem [resolvable:$true] %s157
          %163 = dma.hbm_to_vmem [thread:$0]  %s156, 1024, %s158, %s146, 64, 64, 4
        $region24: #{tpu_custom_call.1} parent=15 // pred_fallthru
          _
      $region16: #{tpu_custom_call.1} parent=5 // pred_fallthru
        _
      %p164 = scmp.le.s32.totalorder 1, %s22
      %p165 = scmp.lt.s32.totalorder %s22, 9
      %p166 = pnand %p164, %p165
      %p167 = pneg %p166
      // Predicated region
      $region25: #{tpu_custom_call.1} parent=5 // pred_check
        _
      $region26: #{tpu_custom_call.1} parent=5 // pred_check_branch
        %169 = sbr.rel (%p166) target = $region28
      $region27: #{tpu_custom_call.1} parent=5 // pred_region
        %s170 = ssub.s32 %s22, 1
        %s171 = sand.u32 %s35, 1
        %s172 = scalar_lea.sflag [#allocation5], %s171
        %s173 = sand.u32 %s35, 1
        %s174 = smul.addr %s173, 64
        %s175 = scalar_lea.vmem [#allocation4], %s174
        // Predicated region
        $region29: #{tpu_custom_call.1} parent=27 // pred_check
          %p176 = pneg %p48
        $region30: #{tpu_custom_call.1} parent=27 // pred_check_branch
          %178 = sbr.rel (%p176) target = $region32
        $region31: #{tpu_custom_call.1} parent=27 // pred_region
          %179 = dma.done %s172, 1024
        $region32: #{tpu_custom_call.1} parent=27 // pred_fallthru
          _
        %s180 = sand.u32 %s63, 1
        %s181 = scalar_lea.sflag [#allocation8], %s180
        %s182 = sand.u32 %s63, 1
        %s183 = smul.addr %s182, 64
        %s184 = scalar_lea.vmem [#allocation7], %s183
        // Predicated region
        $region33: #{tpu_custom_call.1} parent=27 // pred_check
          %p185 = pneg %p76
        $region34: #{tpu_custom_call.1} parent=27 // pred_check_branch
          %187 = sbr.rel (%p185) target = $region36
        $region35: #{tpu_custom_call.1} parent=27 // pred_region
          %188 = dma.done %s181, 1024
        $region36: #{tpu_custom_call.1} parent=27 // pred_fallthru
          _
        %s189 = sand.u32 %s35, 1
        %s190 = scalar_lea.sflag [#allocation5], %s189
        %s191 = sand.u32 %s35, 1
        %s192 = smul.addr %s191, 64
        %s193 = scalar_lea.vmem [#allocation4], %s192
        %p194 = pneg %p48
        %p195 = pneg %p45
        %s196 = sand.u32 %s63, 1
        %s197 = scalar_lea.sflag [#allocation8], %s196
        %s198 = sand.u32 %s63, 1
        %s199 = smul.addr %s198, 64
        %s200 = scalar_lea.vmem [#allocation7], %s199
        %p201 = pneg %p76
        %p202 = pneg %p73
        %p203 = pneg %p102
        %p204 = pneg %p99
        %s205 = sand.u32 %s89, 1
        %s206 = scalar_lea.sflag [#allocation6], %s205
        %s207 = sand.u32 %s89, 1
        %s208 = smul.addr %s207, 64
        %s209 = scalar_lea.vmem [#allocation9], %s208
        %s210 = smul.u32 16, %s27
        %s211 = sld [smem:[#allocation3 + %s27]]
        %s212 = smul.u32 16, %s27
        %v214 = vld [vmem:[%s175] sm:$0xf]
        %v215 = vld [vmem:[%s175 + $0x4] sm:$0xf]
        %v216 = vld [vmem:[%s175 + $0x8] sm:$0xf]
        %v217 = vld [vmem:[%s175 + $0xc] sm:$0xf]
        %v218 = vld [vmem:[%s175 + $0x10] sm:$0xf]
        %v219 = vld [vmem:[%s175 + $0x14] sm:$0xf]
        %v220 = vld [vmem:[%s175 + $0x18] sm:$0xf]
        %v221 = vld [vmem:[%s175 + $0x1c] sm:$0xf]
        %v222 = vld [vmem:[%s175 + $0x20] sm:$0xf]
        %v223 = vld [vmem:[%s175 + $0x24] sm:$0xf]
        %v224 = vld [vmem:[%s175 + $0x28] sm:$0xf]
        %v225 = vld [vmem:[%s175 + $0x2c] sm:$0xf]
        %v226 = vld [vmem:[%s175 + $0x30] sm:$0xf]
        %v227 = vld [vmem:[%s175 + $0x34] sm:$0xf]
        %v228 = vld [vmem:[%s175 + $0x38] sm:$0xf]
        %v229 = vld [vmem:[%s175 + $0x3c] sm:$0xf]
        %v230 = vld [vmem:[%s184] sm:$0xf]
        %v231 = vld [vmem:[%s184 + $0x4] sm:$0xf]
        %v232 = vld [vmem:[%s184 + $0x8] sm:$0xf]
        %v233 = vld [vmem:[%s184 + $0xc] sm:$0xf]
        %v234 = vld [vmem:[%s184 + $0x10] sm:$0xf]
        %v235 = vld [vmem:[%s184 + $0x14] sm:$0xf]
        %v236 = vld [vmem:[%s184 + $0x18] sm:$0xf]
        %v237 = vld [vmem:[%s184 + $0x1c] sm:$0xf]
        %v238 = vld [vmem:[%s184 + $0x20] sm:$0xf]
        %v239 = vld [vmem:[%s184 + $0x24] sm:$0xf]
        %v240 = vld [vmem:[%s184 + $0x28] sm:$0xf]
        %v241 = vld [vmem:[%s184 + $0x2c] sm:$0xf]
        %v242 = vld [vmem:[%s184 + $0x30] sm:$0xf]
        %v243 = vld [vmem:[%s184 + $0x34] sm:$0xf]
        %v244 = vld [vmem:[%s184 + $0x38] sm:$0xf]
        %v245 = vld [vmem:[%s184 + $0x3c] sm:$0xf]
        %v262 = vunpack.c.l.b16 %v214
        %v263 = vunpack.c.l.b16 %v215
        %v264 = vunpack.c.l.b16 %v216
        %v265 = vunpack.c.l.b16 %v217
        %v266 = vunpack.c.l.b16 %v218
        %v267 = vunpack.c.l.b16 %v219
        %v268 = vunpack.c.l.b16 %v220
        %v269 = vunpack.c.l.b16 %v221
        %v270 = vunpack.c.l.b16 %v222
        %v271 = vunpack.c.l.b16 %v223
        %v272 = vunpack.c.l.b16 %v224
        %v273 = vunpack.c.l.b16 %v225
        %v274 = vunpack.c.l.b16 %v226
        %v275 = vunpack.c.l.b16 %v227
        %v276 = vunpack.c.l.b16 %v228
        %v277 = vunpack.c.l.b16 %v229
        %v278 = vpack.c.b16 %v263, %v262
        %v279 = vpack.c.b16 %v265, %v264
        %v280 = vpack.c.b16 %v267, %v266
        %v281 = vpack.c.b16 %v269, %v268
        %v282 = vpack.c.b16 %v271, %v270
        %v283 = vpack.c.b16 %v273, %v272
        %v284 = vpack.c.b16 %v275, %v274
        %v285 = vpack.c.b16 %v277, %v276
        %v310 = vunpack.c.l.b16 %v230
        %v311 = vunpack.c.l.b16 %v231
        %v312 = vunpack.c.l.b16 %v232
        %v313 = vunpack.c.l.b16 %v233
        %v314 = vunpack.c.l.b16 %v234
        %v315 = vunpack.c.l.b16 %v235
        %v316 = vunpack.c.l.b16 %v236
        %v317 = vunpack.c.l.b16 %v237
        %v318 = vunpack.c.l.b16 %v238
        %v319 = vunpack.c.l.b16 %v239
        %v320 = vunpack.c.l.b16 %v240
        %v321 = vunpack.c.l.b16 %v241
        %v322 = vunpack.c.l.b16 %v242
        %v323 = vunpack.c.l.b16 %v243
        %v324 = vunpack.c.l.b16 %v244
        %v325 = vunpack.c.l.b16 %v245
        %v326 = vpack.c.b16 %v311, %v310
        %v327 = vpack.c.b16 %v313, %v312
        %v328 = vpack.c.b16 %v315, %v314
        %v329 = vpack.c.b16 %v317, %v316
        %v330 = vpack.c.b16 %v319, %v318
        %v331 = vpack.c.b16 %v321, %v320
        %v332 = vpack.c.b16 %v323, %v322
        %v333 = vpack.c.b16 %v325, %v324
        %342 = vmatprep.subr.bf16.mxu0 0
        %343 = vmatpush1.bf16.msra.mxu0 %v326
        %344 = vmatprep.subr.bf16.mxu0 0
        %345 = vmatpush1.bf16.msra.mxu0 %v327
        %346 = vmatprep.subr.bf16.mxu0 0
        %347 = vmatpush1.bf16.msra.mxu0 %v328
        %348 = vmatprep.subr.bf16.mxu0 0
        %349 = vmatpush1.bf16.msra.mxu0 %v329
        %350 = vmatprep.subr.bf16.mxu0 0
        %351 = vmatpush1.bf16.msra.mxu0 %v330
        %352 = vmatprep.subr.bf16.mxu0 0
        %353 = vmatpush1.bf16.msra.mxu0 %v331
        %354 = vmatprep.subr.bf16.mxu0 0
        %355 = vmatpush1.bf16.msra.mxu0 %v332
        %356 = vmatprep.subr.bf16.mxu0 0
        %357 = vmatpush1.bf16.msra.mxu0 %v333
        %358 = vmatprep.subr.bf16.mxu0 0
        %359 = vmatpush1.bf16.msra.mxu0 0
        %360 = vmatprep.subr.bf16.mxu0 0
        %361 = vmatpush1.bf16.msra.mxu0 0
        %362 = vmatprep.subr.bf16.mxu0 0
        %363 = vmatpush1.bf16.msra.mxu0 0
        %364 = vmatprep.subr.bf16.mxu0 0
        %365 = vmatpush1.bf16.msra.mxu0 0
        %366 = vmatprep.subr.bf16.mxu0 0
        %367 = vmatpush1.bf16.msra.mxu0 0
        %368 = vmatprep.subr.bf16.mxu0 0
        %369 = vmatpush1.bf16.msra.mxu0 0
        %370 = vmatprep.subr.bf16.mxu0 0
        %371 = vmatpush1.bf16.msra.mxu0 0
        %372 = vmatprep.subr.bf16.mxu0 0
        %373 = vmatpush1.bf16.msra.mxu0 0
        %374 = vmatprep.mubr.bf16.mxu0 0
        %375 = vmatmul.mubr.bf16.gmra.mrb[0].mxu0 %v278
        %v376 = vpop.f32.mrb[0].mxu0
        %v377 = vadd.f32 0.0, %v376
        %v378 = vpop.f32.mrb[0].mxu0
        %v379 = vpop.f32.mrb[0].mxu0
        %v380 = vadd.f32 0.0, %v379
        %v381 = vpop.f32.mrb[0].mxu0
        %382 = vmatprep.mubr.bf16.mxu0 0
        %383 = vmatmul.mubr.bf16.gmra.mrb[0].mxu0 %v279
        %v384 = vpop.f32.mrb[0].mxu0
        %v385 = vadd.f32 0.0, %v384
        %v386 = vpop.f32.mrb[0].mxu0
        %v387 = vpop.f32.mrb[0].mxu0
        %v388 = vadd.f32 0.0, %v387
        %v389 = vpop.f32.mrb[0].mxu0
        %390 = vmatprep.mubr.bf16.mxu0 0
        %391 = vmatmul.mubr.bf16.gmra.mrb[0].mxu0 %v280
        %v392 = vpop.f32.mrb[0].mxu0
        %v393 = vadd.f32 0.0, %v392
        %v394 = vpop.f32.mrb[0].mxu0
        %v395 = vpop.f32.mrb[0].mxu0
        %v396 = vadd.f32 0.0, %v395
        %v397 = vpop.f32.mrb[0].mxu0
        %398 = vmatprep.mubr.bf16.mxu0 0
        %399 = vmatmul.mubr.bf16.gmra.mrb[0].mxu0 %v281
        %v400 = vpop.f32.mrb[0].mxu0
        %v401 = vadd.f32 0.0, %v400
        %v402 = vpop.f32.mrb[0].mxu0
        %v403 = vpop.f32.mrb[0].mxu0
        %v404 = vadd.f32 0.0, %v403
        %v405 = vpop.f32.mrb[0].mxu0
        %406 = vmatprep.mubr.bf16.mxu0 0
        %407 = vmatmul.mubr.bf16.gmra.mrb[0].mxu0 %v282
        %v408 = vpop.f32.mrb[0].mxu0
        %v409 = vadd.f32 0.0, %v408
        %v410 = vpop.f32.mrb[0].mxu0
        %v411 = vpop.f32.mrb[0].mxu0
        %v412 = vadd.f32 0.0, %v411
        %v413 = vpop.f32.mrb[0].mxu0
        %414 = vmatprep.mubr.bf16.mxu0 0
        %415 = vmatmul.mubr.bf16.gmra.mrb[0].mxu0 %v283
        %v416 = vpop.f32.mrb[0].mxu0
        %v417 = vadd.f32 0.0, %v416
        %v418 = vpop.f32.mrb[0].mxu0
        %v419 = vpop.f32.mrb[0].mxu0
        %v420 = vadd.f32 0.0, %v419
        %v421 = vpop.f32.mrb[0].mxu0
        %422 = vmatprep.mubr.bf16.mxu0 0
        %423 = vmatmul.mubr.bf16.gmra.mrb[0].mxu0 %v284
        %v424 = vpop.f32.mrb[0].mxu0
        %v425 = vadd.f32 0.0, %v424
        %v426 = vpop.f32.mrb[0].mxu0
        %v427 = vpop.f32.mrb[0].mxu0
        %v428 = vadd.f32 0.0, %v427
        %v429 = vpop.f32.mrb[0].mxu0
        %430 = vmatprep.mubr.bf16.mxu0 0
        %431 = vmatmul.mubr.bf16.gmra.mrb[0].mxu0 %v285
        %v432 = vpop.f32.mrb[0].mxu0
        %v433 = vadd.f32 0.0, %v432
        %v434 = vpop.f32.mrb[0].mxu0
        %v435 = vpop.f32.mrb[0].mxu0
        %v436 = vadd.f32 0.0, %v435
        %v437 = vpop.f32.mrb[0].mxu0
        %438 = vdwg.mxu0
        %v439 = vpack.c.bf16 %v380, %v377
        %v440 = vpack.c.bf16 %v388, %v385
        %v441 = vpack.c.bf16 %v396, %v393
        %v442 = vpack.c.bf16 %v404, %v401
        %v443 = vpack.c.bf16 %v412, %v409
        %v444 = vpack.c.bf16 %v420, %v417
        %v445 = vpack.c.bf16 %v428, %v425
        %v446 = vpack.c.bf16 %v436, %v433
        %v455 = vunpack.c.l.b16 %v439
        %v456 = vunpack.c.h.b16 %v439
        %v457 = vunpack.c.l.b16 %v440
        %v458 = vunpack.c.h.b16 %v440
        %v459 = vunpack.c.l.b16 %v441
        %v460 = vunpack.c.h.b16 %v441
        %v461 = vunpack.c.l.b16 %v442
        %v462 = vunpack.c.h.b16 %v442
        %v463 = vunpack.c.l.b16 %v443
        %v464 = vunpack.c.h.b16 %v443
        %v465 = vunpack.c.l.b16 %v444
        %v466 = vunpack.c.h.b16 %v444
        %v467 = vunpack.c.l.b16 %v445
        %v468 = vunpack.c.h.b16 %v445
        %v469 = vunpack.c.l.b16 %v446
        %v470 = vunpack.c.h.b16 %v446
        %v471 = vpack.c.b16 %v455, %v455
        %v472 = vpack.c.b16 %v456, %v456
        %v473 = vpack.c.b16 %v457, %v457
        %v474 = vpack.c.b16 %v458, %v458
        %v475 = vpack.c.b16 %v459, %v459
        %v476 = vpack.c.b16 %v460, %v460
        %v477 = vpack.c.b16 %v461, %v461
        %v478 = vpack.c.b16 %v462, %v462
        %v479 = vpack.c.b16 %v463, %v463
        %v480 = vpack.c.b16 %v464, %v464
        %v481 = vpack.c.b16 %v465, %v465
        %v482 = vpack.c.b16 %v466, %v466
        %v483 = vpack.c.b16 %v467, %v467
        %v484 = vpack.c.b16 %v468, %v468
        %v485 = vpack.c.b16 %v469, %v469
        %v486 = vpack.c.b16 %v470, %v470
        %503 = vst [vmem:[%s209] sm:$0xf] %v471
        %504 = vst [vmem:[%s209 + $0x4] sm:$0xf] %v472
        %505 = vst [vmem:[%s209 + $0x8] sm:$0xf] %v473
        %506 = vst [vmem:[%s209 + $0xc] sm:$0xf] %v474
        %507 = vst [vmem:[%s209 + $0x10] sm:$0xf] %v475
        %508 = vst [vmem:[%s209 + $0x14] sm:$0xf] %v476
        %509 = vst [vmem:[%s209 + $0x18] sm:$0xf] %v477
        %510 = vst [vmem:[%s209 + $0x1c] sm:$0xf] %v478
        %511 = vst [vmem:[%s209 + $0x20] sm:$0xf] %v479
        %512 = vst [vmem:[%s209 + $0x24] sm:$0xf] %v480
        %513 = vst [vmem:[%s209 + $0x28] sm:$0xf] %v481
        %514 = vst [vmem:[%s209 + $0x2c] sm:$0xf] %v482
        %515 = vst [vmem:[%s209 + $0x30] sm:$0xf] %v483
        %516 = vst [vmem:[%s209 + $0x34] sm:$0xf] %v484
        %517 = vst [vmem:[%s209 + $0x38] sm:$0xf] %v485
        %518 = vst [vmem:[%s209 + $0x3c] sm:$0xf] %v486
        %s519 = sand.u32 %s89, 1
        %s520 = scalar_lea.sflag [#allocation6], %s519
        %s521 = sand.u32 %s89, 1
        %s522 = smul.addr %s521, 64
        %s523 = scalar_lea.vmem [#allocation9], %s522
        // Predicated region
        $region37: #{tpu_custom_call.1} parent=27 // pred_check
          %p524 = pneg %p99
        $region38: #{tpu_custom_call.1} parent=27 // pred_check_branch
          %526 = sbr.rel (%p524) target = $region40
        $region39: #{tpu_custom_call.1} parent=27 // pred_region
          %s527 = smul.u32 16, %s27
          %s529 = ssub.s32 1024, 1024
          %530 = vsyncadd %s520, %s529
          %s531 = smul.addr %s527, 64
          %s532 = scalar_lea.hbm %s3, %s531
          %s533 = sshll.u32 %s523, 4
          %s534 = int_to_ptr.vmem [resolvable:$true] %s533
          %539 = dma.vmem_to_hbm [thread:$0]  %s534, 1024, %s532, %s520, 64, 64, 4
        $region40: #{tpu_custom_call.1} parent=27 // pred_fallthru
          _
      $region28: #{tpu_custom_call.1} parent=5 // pred_fallthru
        _
      %p540 = scmp.le.s32.totalorder 2, %s22
      // Predicated region
      $region41: #{tpu_custom_call.1} parent=5 // pred_check
        %p541 = pneg %p540
      $region42: #{tpu_custom_call.1} parent=5 // pred_check_branch
        %543 = sbr.rel (%p541) target = $region44
      $region43: #{tpu_custom_call.1} parent=5 // pred_region
        %s544 = ssub.s32 %s22, 2
        // Predicated region
        $region45: #{tpu_custom_call.1} parent=43 // pred_check
          %p545 = pneg %p105
        $region46: #{tpu_custom_call.1} parent=43 // pred_check_branch
          %547 = sbr.rel (%p545) target = $region48
        $region47: #{tpu_custom_call.1} parent=43 // pred_region
          %s548 = sand.u32 %s90, 1
          %s549 = scalar_lea.sflag [#allocation6], %s548
          %s550 = sand.u32 %s90, 1
          %s551 = smul.addr %s550, 64
          %s552 = scalar_lea.vmem [#allocation9], %s551
          %553 = dma.done %s549, 1024
        $region48: #{tpu_custom_call.1} parent=43 // pred_fallthru
          _
      $region44: #{tpu_custom_call.1} parent=5 // pred_fallthru
        _
    $region6: #{tpu_custom_call.1} parent=1 // loop_footer
      %s26 = sadd.s32 1, %s22
    $region7: #{tpu_custom_call.1} parent=1 // loop_footer_branch
      %21 = sbr.rel target = $region3
    $region8: #{tpu_custom_call.1} parent=1 // loop_exit
      _
    %554 = vsyncpa [#allocation5], 1
    %s555 = scalar_lea.sflag [#allocation5], 1
    %556 = vsyncpa %s555, 1
    %557 = vsyncpa [#allocation8], 1
    %s558 = scalar_lea.sflag [#allocation8], 1
    %559 = vsyncpa %s558, 1
    %560 = vsyncpa [#allocation6], 1
    %s561 = scalar_lea.sflag [#allocation6], 1
    %562 = vsyncpa %s561, 1

</llo_original>
